<compile_context>
chip_gen: v7x
topology: tpu7x:2x2x1
jax: 0.10.0
libtpu: 0.0.40
codegen_flags: <defaults>
</compile_context>

<pallas_src>
import functools

import jax
import jax.numpy as jnp
from jax.experimental import pallas as pl
from jax.experimental.pallas import tpu as pltpu

MIB = 1024 * 1024


def _round_up(x: int, m: int) -> int:
    return ((x + m - 1) // m) * m


def _sublane_pack(dtype) -> int:
    """Rows per packed sublane group: 8 for f32, 16 for bf16, 32 for int8/fp8."""
    return max(8, 32 // jnp.dtype(dtype).itemsize)


def _vmem_budget():
    """(tile-footprint budget, scoped-vmem limit cap, likely >=2 TensorCores)."""
    phys = 64 * MIB  # conservative default: assume v7x (64 MiB per TC, 2 TCs)
    try:
        phys = int(pltpu.get_tpu_info().vmem_capacity_bytes)
    except Exception:
        pass
    if phys >= 100 * MIB:            # v5e / v6e: 128 MiB physical, single TC
        return 80 * MIB, 100 * MIB, False
    return 36 * MIB, 48 * MIB, True  # v7x: keep 2-deep pipelining intact


def _pick_lane_tile(d_pad128: int, candidates) -> int:
    """Candidate (multiple of 128) minimizing padding; ties -> larger tile."""
    best = None
    for c in candidates:
        key = (_round_up(d_pad128, c), -c)
        if best is None or key < best[0]:
            best = (key, c)
    return best[1]


def _pick_tm(batch: int, pack: int) -> int:
    """Sublane-packed M tile that minimizes batch padding."""
    if batch <= 512:
        return _round_up(batch, pack)
    best = None
    for c in (512, 256, 128):
        key = (_round_up(batch, c), -c)
        if best is None or key < best[0]:
            best = (key, c)
    return best[1]


def _footprint_bytes(tm, tn, tk, op_item, out_item, use_scratch) -> int:
    """Double-buffered input/output tiles (+ optional f32 scratch)."""
    fp = 2 * (tm * tk + tk * tn) * op_item + 2 * tm * tn * out_item
    if use_scratch:
        fp += tm * tn * 4
    return fp


# ----------------------------------------------------------------------------
# Kernels.  Grid = (M tiles, N tiles, K tiles); K (reduction) is innermost, so
# the output block index stays fixed while we accumulate over K.
# ----------------------------------------------------------------------------
def _rotate_kernel_out_acc(x_ref, w_ref, o_ref, *, precision):
    """f32 output: accumulate directly into the resident output block."""
    k = pl.program_id(2)
    prod = jnp.dot(x_ref[...], w_ref[...],
                   preferred_element_type=jnp.float32, precision=precision)

    @pl.when(k == 0)
    def _first():
        o_ref[...] = prod

    @pl.when(k > 0)
    def _rest():
        o_ref[...] += prod


def _rotate_kernel_scratch(x_ref, w_ref, o_ref, acc_ref, *, precision):
    """Non-f32 output: f32 scratch accumulator, cast+store on last K step."""
    k = pl.program_id(2)
    prod = jnp.dot(x_ref[...], w_ref[...],
                   preferred_element_type=jnp.float32, precision=precision)

    @pl.when(k == 0)
    def _first():
        acc_ref[...] = prod

    @pl.when(k > 0)
    def _rest():
        acc_ref[...] += prod

    @pl.when(k == pl.num_programs(2) - 1)
    def _store():
        o_ref[...] = acc_ref[...].astype(o_ref.dtype)


# ----------------------------------------------------------------------------
# Wrapper.
# ----------------------------------------------------------------------------
def make_rotate_layer(weight, *, operand_dtype=jnp.bfloat16, out_dtype=None,
                      tn=None, tk=None, precision=None):
    """Prepares (casts + pads) the static weight once and returns f(x) = x @ W."""
    d, d2 = weight.shape
    assert d == d2, weight.shape

    operand_dtype = jnp.dtype(operand_dtype)
    op_item = operand_dtype.itemsize
    pack = _sublane_pack(operand_dtype)

    budget, vmem_cap, two_cores = _vmem_budget()

    d_pad128 = _round_up(d, 128)
    if tk is None:
        tk = _pick_lane_tile(d_pad128, (2048, 1024, 512, 256, 128))
    if tn is None:
        tn = _pick_lane_tile(d_pad128, (512, 256, 128))

    # Keep the double-buffered footprint within the generation-aware budget
    # (checked against the largest tm we would ever pick, worst-case f32 out).
    while _footprint_bytes(512, tn, tk, op_item, 4, True) > budget:
        if tk > 512:
            tk //= 2
        elif tn > 128:
            tn //= 2
        elif tk > 128:
            tk //= 2
        else:
            break

    d_pad_k = _round_up(d, tk)
    d_pad_n = _round_up(d, tn)

    # Static parameter: cast + zero-pad ONCE here, not on every forward call.
    wp = weight.astype(operand_dtype)
    if (d_pad_k, d_pad_n) != (d, d):
        wp = jnp.pad(wp, ((0, d_pad_k - d), (0, d_pad_n - d)))

    if precision is None and operand_dtype == jnp.dtype(jnp.float32):
        # Explicit exact-f32 MXU path (multi-pass, ~3-6x slower than bf16).
        precision = jax.lax.Precision.HIGHEST

    def apply(x):
        batch, dx = x.shape
        assert dx == d, (x.shape, d)
        o_dtype = jnp.dtype(out_dtype) if out_dtype is not None else x.dtype
        out_item = o_dtype.itemsize

        tm = _pick_tm(batch, pack)
        batch_pad = _round_up(batch, tm)

        xo = x.astype(operand_dtype)
        if (batch_pad, d_pad_k) != (batch, d):
            xo = jnp.pad(xo, ((0, batch_pad - batch), (0, d_pad_k - d)))

        # If the grid would collapse to a single (i, j) tile, split N so both
        # TensorCores (v7x) get a "parallel" tile to work on.
        tn_call = tn
        if (two_cores and batch_pad // tm == 1 and d_pad_n // tn == 1
                and tn >= 256):
            tn_call = tn // 2

        grid = (batch_pad // tm, d_pad_n // tn_call, d_pad_k // tk)

        out_is_f32 = o_dtype == jnp.dtype(jnp.float32)
        if out_is_f32:
            kernel = functools.partial(_rotate_kernel_out_acc,
                                       precision=precision)
            scratch_shapes = []
        else:
            kernel = functools.partial(_rotate_kernel_scratch,
                                       precision=precision)
            scratch_shapes = [pltpu.VMEM((tm, tn_call), jnp.float32)]

        fp = _footprint_bytes(tm, tn_call, tk, op_item, out_item,
                              not out_is_f32)
        vmem_limit = int(min(vmem_cap, max(32 * MIB, fp + 8 * MIB)))

        # Honest advisory traffic: x(i,k) is re-read once per j tile and
        # W(k,j) once per i tile; the output is written once.
        n_i, n_j = grid[0], grid[1]
        cost = pl.CostEstimate(
            flops=2 * batch_pad * d_pad_k * d_pad_n,
            transcendentals=0,
            bytes_accessed=(batch_pad * d_pad_k * op_item * n_j
                            + d_pad_k * d_pad_n * op_item * n_i
                            + batch_pad * d_pad_n * out_item),
        )

        out_pad = pl.pallas_call(
            kernel,
            out_shape=jax.ShapeDtypeStruct((batch_pad, d_pad_n), o_dtype),
            grid_spec=pltpu.PrefetchScalarGridSpec(
                num_scalar_prefetch=0,
                grid=grid,
                in_specs=[
                    pl.BlockSpec((tm, tk), lambda i, j, k: (i, k)),
                    pl.BlockSpec((tk, tn_call), lambda i, j, k: (k, j)),
                ],
                out_specs=pl.BlockSpec((tm, tn_call), lambda i, j, k: (i, j)),
                scratch_shapes=scratch_shapes,
            ),
            compiler_params=pltpu.CompilerParams(
                dimension_semantics=("parallel", "parallel", "arbitrary"),
                vmem_limit_bytes=vmem_limit,
            ),
            cost_estimate=cost,
        )(xo, wp)

        if (batch_pad, d_pad_n) != (batch, d):
            out_pad = out_pad[:batch, :d]
        return out_pad

    return apply


def rotate_layer(x, weight, **kwargs):
    """One-shot convenience (re-pads/casts the weight every call).

    Prefer make_rotate_layer(weight)(x) when the weight is a static parameter.
    """
    return make_rotate_layer(weight, **kwargs)(x)


def orthogonal_init(key: jax.Array, n: int, dtype=jnp.float32) -> jax.Array:
    """Orthogonal init (same semantics as torch.nn.init.orthogonal_)."""
    a = jax.random.normal(key, (n, n), dtype=jnp.float32)
    q, r = jnp.linalg.qr(a)
    diag = jnp.diag(r)
    sign = jnp.where(diag == 0, jnp.float32(1.0), jnp.sign(diag))  # safe sign
    return (q * sign[None, :]).astype(dtype)


if __name__ == "__main__":
    key = jax.random.PRNGKey(0)
    k_x, k_w, k_x2, k_w2 = jax.random.split(key, 4)

    # Case 1: tile-aligned shape, default bf16 operands / f32 accum+output.
    batch, d_model = 8, 256
    x = jax.random.normal(k_x, (batch, d_model), dtype=jnp.float32)
    weight = orthogonal_init(k_w, d_model)
    layer = make_rotate_layer(weight)            # weight cast+pad hoisted here
    out = jax.block_until_ready(layer(x))
    ref = x @ weight
    assert out.shape == (batch, d_model) and out.dtype == x.dtype
    assert jnp.allclose(out, ref, atol=5e-2, rtol=5e-2), float(
        jnp.max(jnp.abs(out - ref)))

    # Case 1b: bf16 input -> bf16 output (exercises the f32-scratch kernel).
    out_bf16 = jax.block_until_ready(layer(x.astype(jnp.bfloat16)))
    assert out_bf16.dtype == jnp.bfloat16
    assert jnp.allclose(out_bf16.astype(jnp.float32), ref, atol=8e-2, rtol=8e-2)

    # Case 2: unaligned shape + exact-f32 operand path (pad/slice exercised).
    batch2, d2 = 5, 96
    x2 = jax.random.normal(k_x2, (batch2, d2), dtype=jnp.float32)
    weight2 = orthogonal_init(k_w2, d2)
    out2 = jax.block_until_ready(
        rotate_layer(x2, weight2, operand_dtype=jnp.float32))
    ref2 = x2 @ weight2
    assert out2.shape == (batch2, d2)
    assert jnp.allclose(out2, ref2, atol=1e-4, rtol=1e-4), float(
        jnp.max(jnp.abs(out2 - ref2)))

    print("KERNEL_OK")
</pallas_src>

<mosaic_0001>
module attributes {stable_mosaic.version = 11 : i64} {
  func.func @_rotate_kernel_out_acc(%arg0: i32, %arg1: i32, %arg2: i32, %arg3: memref<16x256xbf16, #tpu.memory_space<vmem>>, %arg4: memref<256x128xbf16, #tpu.memory_space<vmem>>, %arg5: memref<16x128xf32, #tpu.memory_space<vmem>>) attributes {dimension_semantics = [#tpu.dimension_semantics<parallel>, #tpu.dimension_semantics<parallel>, #tpu.dimension_semantics<arbitrary>], iteration_bounds = array<i64: 1, 2, 1>, scalar_prefetch = 0 : i64, scratch_operands = 0 : i64, tpu.core_type = #tpu.core_type<tc>, window_params = [{transform_indices = @transform_0, window_bounds = array<i64: 16, 256>}, {transform_indices = @transform_1, window_bounds = array<i64: 256, 128>}, {transform_indices = @transform_2, window_bounds = array<i64: 16, 128>}]} {
    %c0 = arith.constant 0 : index
    %c0_0 = arith.constant 0 : index
    %0 = vector.load %arg3[%c0, %c0_0] : memref<16x256xbf16, #tpu.memory_space<vmem>>, vector<16x256xbf16>
    %c0_1 = arith.constant 0 : index
    %c0_2 = arith.constant 0 : index
    %1 = vector.load %arg4[%c0_1, %c0_2] : memref<256x128xbf16, #tpu.memory_space<vmem>>, vector<256x128xbf16>
    %cst = arith.constant dense<0.000000e+00> : vector<16x128xf32>
    %2 = tpu.matmul %0, %1, %cst {dimension_numbers = #tpu.dot_dimension_numbers<[1], [0], [0], [1], [0, 0, 1, 1], [], []>} : vector<16x256xbf16>, vector<256x128xbf16>, vector<16x128xf32> -> vector<16x128xf32>
    %c0_i32 = arith.constant 0 : i32
    %3 = arith.cmpi eq, %arg2, %c0_i32 : i32
    %4 = arith.extui %3 : i1 to i32
    %c0_i32_3 = arith.constant 0 : i32
    %5 = arith.cmpi ne, %4, %c0_i32_3 : i32
    scf.if %5 {
      %c0_6 = arith.constant 0 : index
      %c0_7 = arith.constant 0 : index
      %9 = vector.load %arg5[%c0_6, %c0_7] : memref<16x128xf32, #tpu.memory_space<vmem>>, vector<16x128xf32>
      tpu.vector_store %arg5[%c0_6, %c0_7], %2 {strides = array<i32>} : memref<16x128xf32, #tpu.memory_space<vmem>>, vector<16x128xf32>,
    } else {
    }
    %c0_i32_4 = arith.constant 0 : i32
    %6 = arith.cmpi sgt, %arg2, %c0_i32_4 : i32
    %7 = arith.extui %6 : i1 to i32
    %c0_i32_5 = arith.constant 0 : i32
    %8 = arith.cmpi ne, %7, %c0_i32_5 : i32
    scf.if %8 {
      %c0_6 = arith.constant 0 : index
      %c0_7 = arith.constant 0 : index
      %9 = vector.load %arg5[%c0_6, %c0_7] : memref<16x128xf32, #tpu.memory_space<vmem>>, vector<16x128xf32>
      %10 = arith.addf %9, %2 : vector<16x128xf32>
      %c0_8 = arith.constant 0 : index
      %c0_9 = arith.constant 0 : index
      %11 = vector.load %arg5[%c0_8, %c0_9] : memref<16x128xf32, #tpu.memory_space<vmem>>, vector<16x128xf32>
      tpu.vector_store %arg5[%c0_8, %c0_9], %10 {strides = array<i32>} : memref<16x128xf32, #tpu.memory_space<vmem>>, vector<16x128xf32>,
    } else {
    }
    return
  }
  func.func @transform_0(%arg0: i32, %arg1: i32, %arg2: i32) -> (i32, i32) {
    %c0_i32 = arith.constant 0 : i32
    return %arg0, %arg2 : i32, i32
  }
  func.func @transform_1(%arg0: i32, %arg1: i32, %arg2: i32) -> (i32, i32) {
    %c0_i32 = arith.constant 0 : i32
    return %arg2, %arg1 : i32, i32
  }
  func.func @transform_2(%arg0: i32, %arg1: i32, %arg2: i32) -> (i32, i32) {
    %c0_i32 = arith.constant 0 : i32
    return %arg0, %arg1 : i32, i32
  }
}

</mosaic_0001>

<llo_original>
// kernel: tpu_custom_call.1
$region0: #{tpu_custom_call.1}
  #allocation0 [shape = 'u32[]', space=smem, size = 0x4, offset = 0x4, fixed_abs, tag = 'smem constant byte address 0x4 - core index']
  #allocation1 [shape = 'u32[144,128]{1,0:T(1,128)}', space=vmem, size = 0x12000, scoped, tag = 'internal scratch']
  %s0 = inlined_call_operand.hbm [shape: bf16[16,256], index: 0, kind: input, shape index: {}]
  %s1 = inlined_call_operand.hbm [shape: bf16[256,256], index: 1, kind: input, shape index: {}]
  %s2 = inlined_call_operand.hbm [shape: f32[16,256], index: 2, kind: output, shape index: {}]
  %s3 = sld [smem:[#allocation0]]
  $region57: #{tpu_custom_call.1} parent=0
    _
  %s5 = ssub.s32 1, %s3
  %s6 = scalar_select 0, %s5, %s3
  $region1: #{tpu_custom_call.1} parent=0
    #allocation2 [shape = 'u8[8192]{0}', space=vmem, size = 0x2000, scoped, tag = 'input window, operand 0, single buffered']
    #allocation3 [shape = 's32[2]{0}', space=sflag, size = 0x8, scoped, tag = 'scoped memory for tpu_custom_call.1']
    #allocation4 [shape = 's32[2]{0}', space=sflag, size = 0x8, scoped, tag = 'scoped memory for tpu_custom_call.1']
    #allocation5 [shape = 'u8[131072]{0}', space=vmem, size = 0x20000, scoped, tag = 'input window, operand 1']
    #allocation6 [shape = 's32[2]{0}', space=sflag, size = 0x8, scoped, tag = 'scoped memory for tpu_custom_call.1']
    #allocation7 [shape = 'u8[16384]{0}', space=vmem, size = 0x4000, scoped, tag = 'output window, operand 0']
    %7 = vsyncpa [#allocation3], 0
    %8 = vsyncpa [#allocation6], 0
    %s9 = scalar_lea.sflag [#allocation6], 1
    %10 = vsyncpa %s9, 0
    %11 = vsyncpa [#allocation4], 0
    %s12 = scalar_lea.sflag [#allocation4], 1
    %13 = vsyncpa %s12, 0
    loop: start=0, step=1, limit=4
    $region2: #{tpu_custom_call.1} parent=1 // loop_pre_header
      _
    $region3: #{tpu_custom_call.1} parent=1 // loop_header
      %s15 = sphi 0, %s19
      %p16 = scmp.ge.s32.totalorder %s15, 4
      %s22 = sphi 0, %s41
      %s23 = sphi 0, %s37
      %s24 = sphi 0, %s33
      %s25 = sphi 0, %s22
      %s26 = sphi 0, %s23
      %s27 = sphi 0, %s24
      %s28 = sphi 0, %s25
      %s29 = sphi 0, %s26
      %s30 = sphi 0, %s27
      %s46 = sphi 0, %s48
      %s49 = sphi 0, %s46
      %s50 = sphi 0, %s49
      %s66 = sphi 0, %s50
      %s74 = sphi 0, %s76
      %s77 = sphi 0, %s74
      %s78 = sphi 0, %s77
      %s94 = sphi 0, %s78
      %s102 = sphi 0, %s104
      %s105 = sphi 0, %s102
      %s106 = sphi 0, %s105
      %s122 = sphi 0, %s106
    $region4: #{tpu_custom_call.1} parent=1 // loop_header_branch
      %18 = sbr.rel (%p16) target = $region8
    $region5: #{tpu_custom_call.1} parent=1 // loop_body
      %s20 = ssub.s32 %s15, 1
      %s21 = ssub.s32 %s15, 2
      %s31 = sadd.s32 1, %s24
      %p32 = scmp.ge.s32.totalorder %s31, 1
      %s33 = scalar_select %p32, 0, %s31
      %s34 = sadd.s32 1, %s23
      %s35 = scalar_select %p32, %s34, %s23
      %p36 = scmp.ge.s32.totalorder %s35, 2
      %s37 = scalar_select %p36, 0, %s35
      %s38 = sadd.s32 1, %s22
      %s39 = scalar_select %p36, %s38, %s22
      %p40 = scmp.ge.s32.totalorder %s39, 1
      %s41 = scalar_select %p40, 0, %s39
      %s42 = ssub.s32 %s22, %s41
      %s43 = ssub.s32 %s24, %s33
      %s44 = sor.u32 %s42, %s43
      %p45 = scmp.eq.s32.totalorder %s44, 0
      %s47 = sadd.s32 %s46, 1
      %s48 = scalar_select %p45, %s46, %s47
      %p51 = pneg %p45
      %p52 = scmp.eq.s32.totalorder %s15, 1
      %p53 = por %p51, %p52
      %p54 = scmp.ne.s32.totalorder %s46, %s49
      %p55 = scmp.eq.s32.totalorder %s15, 0
      %p56 = por %p54, %p55
      %p57 = scmp.ne.s32.totalorder %s46, %s49
      %p58 = scmp.eq.s32.totalorder %s20, 1
      %p59 = por %p57, %p58
      %p60 = scmp.ne.s32.totalorder %s49, %s50
      %p61 = scmp.eq.s32.totalorder %s20, 0
      %p62 = por %p60, %p61
      %p63 = scmp.ne.s32.totalorder %s49, %s50
      %p64 = scmp.eq.s32.totalorder %s21, 1
      %p65 = por %p63, %p64
      %p67 = scmp.ne.s32.totalorder %s50, %s66
      %p68 = scmp.eq.s32.totalorder %s21, 0
      %p69 = por %p67, %p68
      %s70 = ssub.s32 %s24, %s33
      %s71 = ssub.s32 %s23, %s37
      %s72 = sor.u32 %s70, %s71
      %p73 = scmp.eq.s32.totalorder %s72, 0
      %s75 = sadd.s32 %s74, 1
      %s76 = scalar_select %p73, %s74, %s75
      %p79 = pneg %p73
      %p80 = scmp.eq.s32.totalorder %s15, 1
      %p81 = por %p79, %p80
      %p82 = scmp.ne.s32.totalorder %s74, %s77
      %p83 = scmp.eq.s32.totalorder %s15, 0
      %p84 = por %p82, %p83
      %p85 = scmp.ne.s32.totalorder %s74, %s77
      %p86 = scmp.eq.s32.totalorder %s20, 1
      %p87 = por %p85, %p86
      %p88 = scmp.ne.s32.totalorder %s77, %s78
      %p89 = scmp.eq.s32.totalorder %s20, 0
      %p90 = por %p88, %p89
      %p91 = scmp.ne.s32.totalorder %s77, %s78
      %p92 = scmp.eq.s32.totalorder %s21, 1
      %p93 = por %p91, %p92
      %p95 = scmp.ne.s32.totalorder %s78, %s94
      %p96 = scmp.eq.s32.totalorder %s21, 0
      %p97 = por %p95, %p96
      %s98 = ssub.s32 %s22, %s41
      %s99 = ssub.s32 %s23, %s37
      %s100 = sor.u32 %s98, %s99
      %p101 = scmp.eq.s32.totalorder %s100, 0
      %s103 = sadd.s32 %s102, 1
      %s104 = scalar_select %p101, %s102, %s103
      %p107 = pneg %p101
      %p108 = scmp.eq.s32.totalorder %s15, 1
      %p109 = por %p107, %p108
      %p110 = scmp.ne.s32.totalorder %s102, %s105
      %p111 = scmp.eq.s32.totalorder %s15, 0
      %p112 = por %p110, %p111
      %p113 = scmp.ne.s32.totalorder %s102, %s105
      %p114 = scmp.eq.s32.totalorder %s20, 1
      %p115 = por %p113, %p114
      %p116 = scmp.ne.s32.totalorder %s105, %s106
      %p117 = scmp.eq.s32.totalorder %s20, 0
      %p118 = por %p116, %p117
      %p119 = scmp.ne.s32.totalorder %s105, %s106
      %p120 = scmp.eq.s32.totalorder %s21, 1
      %p121 = por %p119, %p120
      %p123 = scmp.ne.s32.totalorder %s106, %s122
      %p124 = scmp.eq.s32.totalorder %s21, 0
      %p125 = por %p123, %p124
      %p126 = scmp.le.s32.totalorder 1, %s15
      %p127 = scmp.lt.s32.totalorder %s15, 3
      %p128 = pnand %p126, %p127
      %p129 = pneg %p128
      // Predicated region
      $region9: #{tpu_custom_call.1} parent=5 // pred_check
        _
      $region10: #{tpu_custom_call.1} parent=5 // pred_check_branch
        %131 = sbr.rel (%p128) target = $region12
      $region11: #{tpu_custom_call.1} parent=5 // pred_region
        %s132 = ssub.s32 %s15, 1
        // Predicated region
        $region13: #{tpu_custom_call.1} parent=11 // pred_check
          %p133 = pneg %p62
        $region14: #{tpu_custom_call.1} parent=11 // pred_check_branch
          %135 = sbr.rel (%p133) target = $region16
        $region15: #{tpu_custom_call.1} parent=11 // pred_region
          %s136 = smul.u32 2, %s25
          %s137 = smul.u32 2, %s27
          %s139 = ssub.s32 256, 256
          %140 = vsyncadd [#allocation3], %s139
          %s141 = smul.addr %s136, 2
          %s142 = sadd.s32 %s137, %s141
          %s143 = smul.addr %s142, 64
          %s144 = scalar_lea.hbm %s0, %s143
          %s145 = sshll.u32 [#allocation2], 4
          %s146 = int_to_ptr.vmem [resolvable:$true] %s145
          %151 = dma.hbm_to_vmem [thread:$0]  %s144, 256, %s146, [#allocation3], 128, 128, 8
        $region16: #{tpu_custom_call.1} parent=11 // pred_fallthru
          _
      $region12: #{tpu_custom_call.1} parent=5 // pred_fallthru
        _
      %p152 = scmp.lt.s32.totalorder %s15, 2
      // Predicated region
      $region17: #{tpu_custom_call.1} parent=5 // pred_check
        %p153 = pneg %p152
      $region18: #{tpu_custom_call.1} parent=5 // pred_check_branch
        %155 = sbr.rel (%p153) target = $region20
      $region19: #{tpu_custom_call.1} parent=5 // pred_region
        // Predicated region
        $region21: #{tpu_custom_call.1} parent=19 // pred_check
          %p156 = pneg %p84
        $region22: #{tpu_custom_call.1} parent=19 // pred_check_branch
          %158 = sbr.rel (%p156) target = $region24
        $region23: #{tpu_custom_call.1} parent=19 // pred_region
          %s159 = sand.u32 %s74, 1
          %s160 = scalar_lea.sflag [#allocation6], %s159
          %s161 = sand.u32 %s74, 1
          %s162 = smul.addr %s161, 128
          %s163 = scalar_lea.vmem [#allocation5], %s162
          %s164 = smul.u32 32, %s24
          %s166 = ssub.s32 2048, 2048
          %167 = vsyncadd %s160, %s166
          %s168 = smul.addr %s164, 2
          %s169 = sadd.s32 %s23, %s168
          %s170 = smul.addr %s169, 64
          %s171 = scalar_lea.hbm %s1, %s170
          %s172 = sshll.u32 %s163, 4
          %s173 = int_to_ptr.vmem [resolvable:$true] %s172
          %178 = dma.hbm_to_vmem [thread:$0]  %s171, 2048, %s173, %s160, 128, 64, 4
        $region24: #{tpu_custom_call.1} parent=19 // pred_fallthru
          _
      $region20: #{tpu_custom_call.1} parent=5 // pred_fallthru
        _
      %p179 = scmp.le.s32.totalorder 1, %s15
      %p180 = scmp.lt.s32.totalorder %s15, 3
      %p181 = pnand %p179, %p180
      %p182 = pneg %p181
      // Predicated region
      $region25: #{tpu_custom_call.1} parent=5 // pred_check
        _
      $region26: #{tpu_custom_call.1} parent=5 // pred_check_branch
        %184 = sbr.rel (%p181) target = $region28
      $region27: #{tpu_custom_call.1} parent=5 // pred_region
        %s185 = ssub.s32 %s15, 1
        // Predicated region
        $region29: #{tpu_custom_call.1} parent=27 // pred_check
          %p186 = pneg %p62
        $region30: #{tpu_custom_call.1} parent=27 // pred_check_branch
          %188 = sbr.rel (%p186) target = $region32
        $region31: #{tpu_custom_call.1} parent=27 // pred_region
          %189 = dma.done [#allocation3], 256
        $region32: #{tpu_custom_call.1} parent=27 // pred_fallthru
          _
        %s190 = sand.u32 %s77, 1
        %s191 = scalar_lea.sflag [#allocation6], %s190
        %s192 = sand.u32 %s77, 1
        %s193 = smul.addr %s192, 128
        %s194 = scalar_lea.vmem [#allocation5], %s193
        // Predicated region
        $region33: #{tpu_custom_call.1} parent=27 // pred_check
          %p195 = pneg %p90
        $region34: #{tpu_custom_call.1} parent=27 // pred_check_branch
          %197 = sbr.rel (%p195) target = $region36
        $region35: #{tpu_custom_call.1} parent=27 // pred_region
          %198 = dma.done %s191, 2048
        $region36: #{tpu_custom_call.1} parent=27 // pred_fallthru
          _
        %p199 = pneg %p62
        %p200 = pneg %p59
        %s201 = sand.u32 %s77, 1
        %s202 = scalar_lea.sflag [#allocation6], %s201
        %s203 = sand.u32 %s77, 1
        %s204 = smul.addr %s203, 128
        %s205 = scalar_lea.vmem [#allocation5], %s204
        %p206 = pneg %p90
        %p207 = pneg %p87
        %p208 = pneg %p118
        %p209 = pneg %p115
        %s210 = sand.u32 %s105, 1
        %s211 = scalar_lea.sflag [#allocation4], %s210
        %s212 = sand.u32 %s105, 1
        %s213 = smul.addr %s212, 16
        %s214 = scalar_lea.vmem [#allocation7], %s213
        %s215 = smul.u32 2, %s25
        %s216 = smul.u32 2, %s27
        %s217 = smul.u32 32, %s27
        %s218 = smul.u32 2, %s25
        %v220 = vld [vmem:[#allocation2] sm:$0xff]
        %v221 = vld [vmem:[#allocation2 + $0x8] sm:$0xff]
        %v222 = vld [vmem:[%s194] sm:$0xf]
        %v223 = vld [vmem:[%s194 + $0x4] sm:$0xf]
        %v224 = vld [vmem:[%s194 + $0x8] sm:$0xf]
        %v225 = vld [vmem:[%s194 + $0xc] sm:$0xf]
        %v226 = vld [vmem:[%s194 + $0x10] sm:$0xf]
        %v227 = vld [vmem:[%s194 + $0x14] sm:$0xf]
        %v228 = vld [vmem:[%s194 + $0x18] sm:$0xf]
        %v229 = vld [vmem:[%s194 + $0x1c] sm:$0xf]
        %v230 = vld [vmem:[%s194 + $0x20] sm:$0xf]
        %v231 = vld [vmem:[%s194 + $0x24] sm:$0xf]
        %v232 = vld [vmem:[%s194 + $0x28] sm:$0xf]
        %v233 = vld [vmem:[%s194 + $0x2c] sm:$0xf]
        %v234 = vld [vmem:[%s194 + $0x30] sm:$0xf]
        %v235 = vld [vmem:[%s194 + $0x34] sm:$0xf]
        %v236 = vld [vmem:[%s194 + $0x38] sm:$0xf]
        %v237 = vld [vmem:[%s194 + $0x3c] sm:$0xf]
        %v238 = vld [vmem:[%s194 + $0x40] sm:$0xf]
        %v239 = vld [vmem:[%s194 + $0x44] sm:$0xf]
        %v240 = vld [vmem:[%s194 + $0x48] sm:$0xf]
        %v241 = vld [vmem:[%s194 + $0x4c] sm:$0xf]
        %v242 = vld [vmem:[%s194 + $0x50] sm:$0xf]
        %v243 = vld [vmem:[%s194 + $0x54] sm:$0xf]
        %v244 = vld [vmem:[%s194 + $0x58] sm:$0xf]
        %v245 = vld [vmem:[%s194 + $0x5c] sm:$0xf]
        %v246 = vld [vmem:[%s194 + $0x60] sm:$0xf]
        %v247 = vld [vmem:[%s194 + $0x64] sm:$0xf]
        %v248 = vld [vmem:[%s194 + $0x68] sm:$0xf]
        %v249 = vld [vmem:[%s194 + $0x6c] sm:$0xf]
        %v250 = vld [vmem:[%s194 + $0x70] sm:$0xf]
        %v251 = vld [vmem:[%s194 + $0x74] sm:$0xf]
        %v252 = vld [vmem:[%s194 + $0x78] sm:$0xf]
        %v253 = vld [vmem:[%s194 + $0x7c] sm:$0xf]
        %v256 = vunpack.c.l.b16 %v220
        %v257 = vunpack.c.h.b16 %v220
        %v258 = vunpack.c.l.b16 %v221
        %v259 = vunpack.c.h.b16 %v221
        %v260 = vpack.c.b16 %v258, %v256
        %v261 = vpack.c.b16 %v259, %v257
        %v296 = vunpack.c.l.b16 %v222
        %v297 = vunpack.c.l.b16 %v223
        %v298 = vunpack.c.l.b16 %v224
        %v299 = vunpack.c.l.b16 %v225
        %v300 = vunpack.c.l.b16 %v226
        %v301 = vunpack.c.l.b16 %v227
        %v302 = vunpack.c.l.b16 %v228
        %v303 = vunpack.c.l.b16 %v229
        %v304 = vunpack.c.l.b16 %v230
        %v305 = vunpack.c.l.b16 %v231
        %v306 = vunpack.c.l.b16 %v232
        %v307 = vunpack.c.l.b16 %v233
        %v308 = vunpack.c.l.b16 %v234
        %v309 = vunpack.c.l.b16 %v235
        %v310 = vunpack.c.l.b16 %v236
        %v311 = vunpack.c.l.b16 %v237
        %v312 = vunpack.c.l.b16 %v238
        %v313 = vunpack.c.l.b16 %v239
        %v314 = vunpack.c.l.b16 %v240
        %v315 = vunpack.c.l.b16 %v241
        %v316 = vunpack.c.l.b16 %v242
        %v317 = vunpack.c.l.b16 %v243
        %v318 = vunpack.c.l.b16 %v244
        %v319 = vunpack.c.l.b16 %v245
        %v320 = vunpack.c.l.b16 %v246
        %v321 = vunpack.c.l.b16 %v247
        %v322 = vunpack.c.l.b16 %v248
        %v323 = vunpack.c.l.b16 %v249
        %v324 = vunpack.c.l.b16 %v250
        %v325 = vunpack.c.l.b16 %v251
        %v326 = vunpack.c.l.b16 %v252
        %v327 = vunpack.c.l.b16 %v253
        %v328 = vpack.c.b16 %v297, %v296
        %v329 = vpack.c.b16 %v299, %v298
        %v330 = vpack.c.b16 %v301, %v300
        %v331 = vpack.c.b16 %v303, %v302
        %v332 = vpack.c.b16 %v305, %v304
        %v333 = vpack.c.b16 %v307, %v306
        %v334 = vpack.c.b16 %v309, %v308
        %v335 = vpack.c.b16 %v311, %v310
        %v336 = vpack.c.b16 %v313, %v312
        %v337 = vpack.c.b16 %v315, %v314
        %v338 = vpack.c.b16 %v317, %v316
        %v339 = vpack.c.b16 %v319, %v318
        %v340 = vpack.c.b16 %v321, %v320
        %v341 = vpack.c.b16 %v323, %v322
        %v342 = vpack.c.b16 %v325, %v324
        %v343 = vpack.c.b16 %v327, %v326
        %360 = vmatprep.subr.bf16.mxu0 0
        %361 = vmatpush1.bf16.msra.mxu0 %v328
        %362 = vmatprep.subr.bf16.mxu0 0
        %363 = vmatpush1.bf16.msra.mxu0 %v329
        %364 = vmatprep.subr.bf16.mxu0 0
        %365 = vmatpush1.bf16.msra.mxu0 %v330
        %366 = vmatprep.subr.bf16.mxu0 0
        %367 = vmatpush1.bf16.msra.mxu0 %v331
        %368 = vmatprep.subr.bf16.mxu0 0
        %369 = vmatpush1.bf16.msra.mxu0 %v332
        %370 = vmatprep.subr.bf16.mxu0 0
        %371 = vmatpush1.bf16.msra.mxu0 %v333
        %372 = vmatprep.subr.bf16.mxu0 0
        %373 = vmatpush1.bf16.msra.mxu0 %v334
        %374 = vmatprep.subr.bf16.mxu0 0
        %375 = vmatpush1.bf16.msra.mxu0 %v335
        %376 = vmatprep.subr.bf16.mxu0 0
        %377 = vmatpush1.bf16.msra.mxu0 %v336
        %378 = vmatprep.subr.bf16.mxu0 0
        %379 = vmatpush1.bf16.msra.mxu0 %v337
        %380 = vmatprep.subr.bf16.mxu0 0
        %381 = vmatpush1.bf16.msra.mxu0 %v338
        %382 = vmatprep.subr.bf16.mxu0 0
        %383 = vmatpush1.bf16.msra.mxu0 %v339
        %384 = vmatprep.subr.bf16.mxu0 0
        %385 = vmatpush1.bf16.msra.mxu0 %v340
        %386 = vmatprep.subr.bf16.mxu0 0
        %387 = vmatpush1.bf16.msra.mxu0 %v341
        %388 = vmatprep.subr.bf16.mxu0 0
        %389 = vmatpush1.bf16.msra.mxu0 %v342
        %390 = vmatprep.subr.bf16.mxu0 0
        %391 = vmatpush1.bf16.msra.mxu0 %v343
        %392 = vmatprep.mubr.bf16.mxu0 %v261
        %393 = vmatmul.mubr.bf16.gmra.mrb[0].mxu0 %v260
        %v394 = vpop.f32.mrb[0].mxu0
        %v395 = vadd.f32 0.0, %v394
        %v396 = vpop.f32.mrb[0].mxu0
        %v397 = vpop.f32.mrb[0].mxu0
        %v398 = vadd.f32 0.0, %v397
        %v399 = vpop.f32.mrb[0].mxu0
        %400 = vdwg.mxu0
        %p401 = scmp.eq.s32.totalorder %s27, 0
        // Predicated region
        $region37: #{tpu_custom_call.1} parent=27 // pred_check
          %p402 = pneg %p401
        $region38: #{tpu_custom_call.1} parent=27 // pred_check_branch
          %404 = sbr.rel (%p402) target = $region40
        $region39: #{tpu_custom_call.1} parent=27 // pred_region
          %405 = vst [vmem:[%s214] sm:$0xff] %v395
          %406 = vst [vmem:[%s214 + $0x8] sm:$0xff] %v398
        $region40: #{tpu_custom_call.1} parent=27 // pred_fallthru
          _
        %p407 = scmp.gt.s32.totalorder %s27, 0
        // Predicated region
        $region41: #{tpu_custom_call.1} parent=27 // pred_check
          %p408 = pneg %p407
        $region42: #{tpu_custom_call.1} parent=27 // pred_check_branch
          %410 = sbr.rel (%p408) target = $region44
        $region43: #{tpu_custom_call.1} parent=27 // pred_region
          %v411 = vld [vmem:[%s214] sm:$0xff]
          %v412 = vld [vmem:[%s214 + $0x8] sm:$0xff]
          %v413 = vadd.f32 %v411, %v395
          %v414 = vadd.f32 %v412, %v398
          %415 = vst [vmem:[%s214] sm:$0xff] %v413
          %416 = vst [vmem:[%s214 + $0x8] sm:$0xff] %v414
        $region44: #{tpu_custom_call.1} parent=27 // pred_fallthru
          _
        %s417 = sand.u32 %s105, 1
        %s418 = scalar_lea.sflag [#allocation4], %s417
        %s419 = sand.u32 %s105, 1
        %s420 = smul.addr %s419, 16
        %s421 = scalar_lea.vmem [#allocation7], %s420
        // Predicated region
        $region45: #{tpu_custom_call.1} parent=27 // pred_check
          %p422 = pneg %p115
        $region46: #{tpu_custom_call.1} parent=27 // pred_check_branch
          %424 = sbr.rel (%p422) target = $region48
        $region47: #{tpu_custom_call.1} parent=27 // pred_region
          %s425 = smul.u32 2, %s25
          %s427 = ssub.s32 256, 256
          %428 = vsyncadd %s418, %s427
          %s429 = smul.addr %s425, 2
          %s430 = sadd.s32 %s26, %s429
          %s431 = smul.addr %s430, 128
          %s432 = scalar_lea.hbm %s2, %s431
          %s433 = sshll.u32 %s421, 4
          %s434 = int_to_ptr.vmem [resolvable:$true] %s433
          %439 = dma.vmem_to_hbm [thread:$0]  %s434, 256, %s432, %s418, 128, 256, 8
        $region48: #{tpu_custom_call.1} parent=27 // pred_fallthru
          _
      $region28: #{tpu_custom_call.1} parent=5 // pred_fallthru
        _
      %p440 = scmp.le.s32.totalorder 2, %s15
      // Predicated region
      $region49: #{tpu_custom_call.1} parent=5 // pred_check
        %p441 = pneg %p440
      $region50: #{tpu_custom_call.1} parent=5 // pred_check_branch
        %443 = sbr.rel (%p441) target = $region52
      $region51: #{tpu_custom_call.1} parent=5 // pred_region
        %s444 = ssub.s32 %s15, 2
        // Predicated region
        $region53: #{tpu_custom_call.1} parent=51 // pred_check
          %p445 = pneg %p121
        $region54: #{tpu_custom_call.1} parent=51 // pred_check_branch
          %447 = sbr.rel (%p445) target = $region56
        $region55: #{tpu_custom_call.1} parent=51 // pred_region
          %s448 = sand.u32 %s106, 1
          %s449 = scalar_lea.sflag [#allocation4], %s448
          %s450 = sand.u32 %s106, 1
          %s451 = smul.addr %s450, 16
          %s452 = scalar_lea.vmem [#allocation7], %s451
          %453 = dma.done %s449, 256
        $region56: #{tpu_custom_call.1} parent=51 // pred_fallthru
          _
      $region52: #{tpu_custom_call.1} parent=5 // pred_fallthru
        _
    $region6: #{tpu_custom_call.1} parent=1 // loop_footer
      %s19 = sadd.s32 1, %s15
    $region7: #{tpu_custom_call.1} parent=1 // loop_footer_branch
      %14 = sbr.rel target = $region3
    $region8: #{tpu_custom_call.1} parent=1 // loop_exit
      _
    %454 = vsyncpa [#allocation3], 1
    %s455 = scalar_lea.sflag [#allocation3], 1
    %456 = vsyncpa %s455, 1
    %457 = vsyncpa [#allocation6], 1
    %s458 = scalar_lea.sflag [#allocation6], 1
    %459 = vsyncpa %s458, 1
    %460 = vsyncpa [#allocation4], 1
    %s461 = scalar_lea.sflag [#allocation4], 1
    %462 = vsyncpa %s461, 1

</llo_original>
